<compile_context>
chip_gen: v7x
topology: tpu7x:2x2x1
jax: 0.10.0
libtpu: 0.0.40
codegen_flags: <defaults>
</compile_context>

<pallas_src>
import math

import jax
import jax.numpy as jnp
from jax.experimental import pallas as pl
from jax.experimental.pallas import tpu as pltpu


def _make_divisible(v, divisor, min_value=None):
    if min_value is None:
        min_value = divisor
    new_v = max(min_value, int(v + divisor / 2) // divisor * divisor)
    if new_v < 0.9 * v:
        new_v += divisor
    return new_v


def _choose_tb(N, C, HWp, itemsize):
    """Samples per grid step (per performance review).

    Targets: ~1 MiB blocks (large DMAs, amortized per-step overhead), TB*C a
    multiple of 8 (sublane-dense rows), >= 2 grid steps when the batch allows
    it (keep both v7x TensorCores busy), and small selection matrices.
    """
    sub = 8                                        # (8, 128) BlockSpec row unit
    tb_unit = sub // math.gcd(sub, C)              # smallest TB with TB*C % 8 == 0
    bytes_per_sample = C * HWp * itemsize
    tb = max(1, (1 << 20) // bytes_per_sample)     # ~1 MiB per block
    tb = min(tb, max(1, 512 // C))                 # keep gather/scatter/onehot tiny
    if N >= 2 * tb_unit:                           # leave >= 2 grid steps (v7x 2 TCs)
        tb = min(tb, N // 2)
    tb = max(tb_unit, (tb // tb_unit) * tb_unit)   # sublane-align
    tb = min(tb, (-(-N // tb_unit)) * tb_unit)     # never exceed the padded batch
    return int(tb)


def _make_se_kernel(hw_actual):
    inv_hw = 1.0 / float(hw_actual)

    def kernel(x_ref, gather_ref, onehot_ref, scatter_ref,
               w1t_ref, b1_ref, w2t_ref, b2_ref, o_ref):
        # x_ref / o_ref : (R, HWp)   with R = TB*C (sublane-dense, lane-dense)
        # gather_ref    : (TB, R)    0/1, gathers each sample's C rows into lanes
        # onehot_ref    : (R, C)     0/1, row r selects channel r % C
        # scatter_ref   : (R, TB)    0/1, broadcasts sample gates back to rows
        # w1t_ref       : (C, Cr)    b1_ref : (1, Cr)
        # w2t_ref       : (Cr, C)    b2_ref : (1, C)

        # ---- squeeze: per-row spatial mean, f32 accumulation, no f32 tile copy
        pooled_col = jnp.sum(x_ref[...], axis=-1, keepdims=True,
                             dtype=jnp.float32) * inv_hw                 # (R, 1)

        # ---- repack (R, 1) column -> (TB, C) row form with tiny 0/1 matmuls
        onehot = onehot_ref[...]                                         # (R, C)
        pooled_rows = jnp.dot(gather_ref[...], pooled_col * onehot,
                              preferred_element_type=jnp.float32)        # (TB, C)

        # ---- excite: batched over all TB samples in the block
        h = jnp.maximum(
            jnp.dot(pooled_rows, w1t_ref[...],
                    preferred_element_type=jnp.float32) + b1_ref[...], 0.0)   # (TB, Cr)
        z = jnp.dot(h, w2t_ref[...],
                    preferred_element_type=jnp.float32) + b2_ref[...]          # (TB, C)
        # gate_fn == hard_sigmoid(inplace=False) == relu(z + 3) / 6
        # (deliberately NO upper clamp -- that is what the module's forward calls)
        gate = jnp.maximum(z + 3.0, 0.0) * (1.0 / 6.0)                         # (TB, C)

        # ---- scatter gate back to one scale per row: (TB, C) -> (R, 1)
        gate_col = jnp.sum(
            jnp.dot(scatter_ref[...], gate,
                    preferred_element_type=jnp.float32) * onehot,
            axis=-1, keepdims=True)                                       # (R, 1)

        # ---- scale: dominant streaming phase, native dtype, re-read x_ref
        o_ref[...] = x_ref[...] * gate_col.astype(o_ref.dtype)

    return kernel


def squeeze_excite(x_nchw, w1, b1, w2, b2):
    """x_nchw: (N, C, H, W). w1: (Cr, C), b1: (Cr,), w2: (C, Cr), b2: (C,)."""
    N, C, H, W = x_nchw.shape
    Cr = w1.shape[0]
    HW = H * W
    dtype = x_nchw.dtype
    itemsize = jnp.dtype(dtype).itemsize

    # Lane-dense spatial axis: pad HW up to a multiple of 128 (no-op here,
    # HW=256; for GhostNet's 49/196/784 this trades one pad copy for
    # unmasked full-vreg stores inside the kernel).
    HWp = ((HW + 127) // 128) * 128
    x_flat = x_nchw.reshape(N, C, HW)
    if HWp != HW:
        x_flat = jnp.pad(x_flat, ((0, 0), (0, 0), (0, HWp - HW)))

    TB = _choose_tb(N, C, HWp, itemsize)
    Np = pl.cdiv(N, TB) * TB
    if Np != N:
        x_flat = jnp.pad(x_flat, ((0, Np - N), (0, 0), (0, 0)))

    R = TB * C
    x_rows = x_flat.reshape(Np * C, HWp)           # sublane-dense row layout

    # Constant 0/1 selection matrices (tiny, resident in VMEM, fetched once).
    f32 = jnp.float32
    gather = jnp.repeat(jnp.eye(TB, dtype=f32), C, axis=1)    # (TB, R)
    scatter = jnp.repeat(jnp.eye(TB, dtype=f32), C, axis=0)   # (R, TB)
    onehot = jnp.tile(jnp.eye(C, dtype=f32), (TB, 1))         # (R, C)

    # Excite parameters, pre-transposed for row-form batched matmuls.
    w1t = w1.astype(f32).T                                    # (C, Cr)
    w2t = w2.astype(f32).T                                    # (Cr, C)
    b1r = b1.astype(f32).reshape(1, Cr)
    b2r = b2.astype(f32).reshape(1, C)

    grid = (Np // TB,)
    cost = pl.CostEstimate(
        flops=int(2 * Np * C * HWp + 4 * Np * C * Cr),
        transcendentals=0,
        bytes_accessed=int(2 * Np * C * HWp * itemsize
                           + (2 * C * Cr + C + Cr + 2 * TB * R + R * C) * 4),
    )

    out_rows = pl.pallas_call(
        _make_se_kernel(HW),
        out_shape=jax.ShapeDtypeStruct((Np * C, HWp), dtype),
        grid=grid,
        in_specs=[
            # TB samples (R = TB*C rows) per grid step; auto double-buffered.
            pl.BlockSpec((R, HWp), lambda n: (n, 0)),          # x
            # Constant block index -> fetched once, stay resident in VMEM.
            pl.BlockSpec((TB, R), lambda n: (0, 0)),           # gather
            pl.BlockSpec((R, C), lambda n: (0, 0)),            # onehot
            pl.BlockSpec((R, TB), lambda n: (0, 0)),           # scatter
            pl.BlockSpec((C, Cr), lambda n: (0, 0)),           # w1^T
            pl.BlockSpec((1, Cr), lambda n: (0, 0)),           # b1 row
            pl.BlockSpec((Cr, C), lambda n: (0, 0)),           # w2^T
            pl.BlockSpec((1, C), lambda n: (0, 0)),            # b2 row
        ],
        out_specs=pl.BlockSpec((R, HWp), lambda n: (n, 0)),
        compiler_params=pltpu.CompilerParams(
            # Batch-of-blocks axis is independent -> sharded across v7x's two
            # TensorCores; measured no-op on single-TC v5e/v6e.
            dimension_semantics=("parallel",),
        ),
        cost_estimate=cost,
    )(x_rows, gather, onehot, scatter, w1t, b1r, w2t, b2r)

    out = out_rows.reshape(Np, C, HWp)[:N, :, :HW].reshape(N, C, H, W)
    return out


def _reference(x, w1, b1, w2, b2):
    # Pure-JAX reference mirroring the PyTorch module's forward.
    pooled = jnp.mean(x, axis=(2, 3))                          # (N, C)
    h = jnp.maximum(pooled @ w1.T + b1, 0.0)                   # (N, Cr)
    z = h @ w2.T + b2                                          # (N, C)
    gate = jnp.maximum(z + 3.0, 0.0) / 6.0                     # hard_sigmoid (no clamp)
    return x * gate[:, :, None, None]


if __name__ == "__main__":
    # Module config: in_channels=4, se_ratio=0.25, divisor=4 -> reduced=4
    in_channels = 4
    se_ratio = 0.25
    divisor = 4
    reduced_channels = _make_divisible(in_channels * se_ratio, divisor)

    N, C, H, W = 2, in_channels, 16, 16

    key = jax.random.PRNGKey(0)
    kx, k1, k2, k3, k4 = jax.random.split(key, 5)

    x = jax.random.normal(kx, (N, C, H, W), dtype=jnp.float32)
    # Deterministic synthetic parameters (Conv2d 1x1 weights squeezed to 2-D).
    w1 = jax.random.normal(k1, (reduced_channels, in_channels), dtype=jnp.float32) * 0.5
    b1 = jax.random.normal(k2, (reduced_channels,), dtype=jnp.float32) * 0.1
    w2 = jax.random.normal(k3, (in_channels, reduced_channels), dtype=jnp.float32) * 0.5
    b2 = jax.random.normal(k4, (in_channels,), dtype=jnp.float32) * 0.1

    out = jax.block_until_ready(squeeze_excite(x, w1, b1, w2, b2))

    ref = _reference(x, w1, b1, w2, b2)
    assert out.shape == (N, C, H, W)
    assert jnp.allclose(out, ref, atol=1e-5, rtol=1e-5), "mismatch vs reference"

    print("KERNEL_OK")
</pallas_src>

<mosaic_0001>
module attributes {stable_mosaic.version = 11 : i64} {
  func.func @kernel(%arg0: i32, %arg1: memref<8x256xf32, #tpu.memory_space<vmem>>, %arg2: memref<2x8xf32, #tpu.memory_space<vmem>>, %arg3: memref<8x4xf32, #tpu.memory_space<vmem>>, %arg4: memref<8x2xf32, #tpu.memory_space<vmem>>, %arg5: memref<4x4xf32, #tpu.memory_space<vmem>>, %arg6: memref<1x4xf32, #tpu.memory_space<vmem>>, %arg7: memref<4x4xf32, #tpu.memory_space<vmem>>, %arg8: memref<1x4xf32, #tpu.memory_space<vmem>>, %arg9: memref<8x256xf32, #tpu.memory_space<vmem>>) attributes {dimension_semantics = [#tpu.dimension_semantics<parallel>], iteration_bounds = array<i64: 1>, scalar_prefetch = 0 : i64, scratch_operands = 0 : i64, tpu.core_type = #tpu.core_type<tc>, window_params = [{transform_indices = @transform_0, window_bounds = array<i64: 8, 256>}, {pipeline_mode = #tpu.pipeline_mode<synchronous>, transform_indices = @transform_1, window_bounds = array<i64: 2, 8>}, {pipeline_mode = #tpu.pipeline_mode<synchronous>, transform_indices = @transform_2, window_bounds = array<i64: 8, 4>}, {pipeline_mode = #tpu.pipeline_mode<synchronous>, transform_indices = @transform_3, window_bounds = array<i64: 8, 2>}, {pipeline_mode = #tpu.pipeline_mode<synchronous>, transform_indices = @transform_4, window_bounds = array<i64: 4, 4>}, {pipeline_mode = #tpu.pipeline_mode<synchronous>, transform_indices = @transform_5, window_bounds = array<i64: 1, 4>}, {pipeline_mode = #tpu.pipeline_mode<synchronous>, transform_indices = @transform_6, window_bounds = array<i64: 4, 4>}, {pipeline_mode = #tpu.pipeline_mode<synchronous>, transform_indices = @transform_7, window_bounds = array<i64: 1, 4>}, {transform_indices = @transform_8, window_bounds = array<i64: 8, 256>}]} {
    %c0 = arith.constant 0 : index
    %c0_0 = arith.constant 0 : index
    %0 = vector.load %arg1[%c0, %c0_0] : memref<8x256xf32, #tpu.memory_space<vmem>>, vector<8x256xf32>
    %cst = arith.constant dense<0.000000e+00> : vector<8xf32>
    %1 = vector.multi_reduction <add>, %0, %cst [1] : vector<8x256xf32> to vector<8xf32>
    %2 = vector.shape_cast %1 : vector<8xf32> to vector<8x1xf32>
    %cst_1 = arith.constant 3.906250e-03 : f32
    %3 = vector.broadcast %cst_1 : f32 to vector<8x1xf32>
    %4 = arith.mulf %2, %3 : vector<8x1xf32>
    %c0_2 = arith.constant 0 : index
    %c0_3 = arith.constant 0 : index
    %5 = vector.load %arg3[%c0_2, %c0_3] : memref<8x4xf32, #tpu.memory_space<vmem>>, vector<8x4xf32>
    %c0_4 = arith.constant 0 : index
    %c0_5 = arith.constant 0 : index
    %6 = vector.load %arg2[%c0_4, %c0_5] : memref<2x8xf32, #tpu.memory_space<vmem>>, vector<2x8xf32>
    %7 = vector.broadcast %4 : vector<8x1xf32> to vector<8x4xf32>
    %8 = arith.mulf %7, %5 : vector<8x4xf32>
    %cst_6 = arith.constant dense<0.000000e+00> : vector<2x4xf32>
    %9 = tpu.matmul %6, %8, %cst_6 {dimension_numbers = #tpu.dot_dimension_numbers<[1], [0], [0], [1], [0, 0, 1, 1], [], []>} : vector<2x8xf32>, vector<8x4xf32>, vector<2x4xf32> -> vector<2x4xf32>
    %c0_7 = arith.constant 0 : index
    %c0_8 = arith.constant 0 : index
    %10 = vector.load %arg5[%c0_7, %c0_8] : memref<4x4xf32, #tpu.memory_space<vmem>>, vector<4x4xf32>
    %cst_9 = arith.constant dense<0.000000e+00> : vector<2x4xf32>
    %11 = tpu.matmul %9, %10, %cst_9 {dimension_numbers = #tpu.dot_dimension_numbers<[1], [0], [0], [1], [0, 0, 1, 1], [], []>} : vector<2x4xf32>, vector<4x4xf32>, vector<2x4xf32> -> vector<2x4xf32>
    %c0_10 = arith.constant 0 : index
    %c0_11 = arith.constant 0 : index
    %12 = vector.load %arg6[%c0_10, %c0_11] : memref<1x4xf32, #tpu.memory_space<vmem>>, vector<1x4xf32>
    %13 = vector.broadcast %12 : vector<1x4xf32> to vector<2x4xf32>
    %14 = arith.addf %11, %13 : vector<2x4xf32>
    %cst_12 = arith.constant 0.000000e+00 : f32
    %15 = vector.broadcast %cst_12 : f32 to vector<2x4xf32>
    %16 = arith.maximumf %14, %15 : vector<2x4xf32>
    %c0_13 = arith.constant 0 : index
    %c0_14 = arith.constant 0 : index
    %17 = vector.load %arg7[%c0_13, %c0_14] : memref<4x4xf32, #tpu.memory_space<vmem>>, vector<4x4xf32>
    %cst_15 = arith.constant dense<0.000000e+00> : vector<2x4xf32>
    %18 = tpu.matmul %16, %17, %cst_15 {dimension_numbers = #tpu.dot_dimension_numbers<[1], [0], [0], [1], [0, 0, 1, 1], [], []>} : vector<2x4xf32>, vector<4x4xf32>, vector<2x4xf32> -> vector<2x4xf32>
    %c0_16 = arith.constant 0 : index
    %c0_17 = arith.constant 0 : index
    %19 = vector.load %arg8[%c0_16, %c0_17] : memref<1x4xf32, #tpu.memory_space<vmem>>, vector<1x4xf32>
    %20 = vector.broadcast %19 : vector<1x4xf32> to vector<2x4xf32>
    %21 = arith.addf %18, %20 : vector<2x4xf32>
    %cst_18 = arith.constant 3.000000e+00 : f32
    %22 = vector.broadcast %cst_18 : f32 to vector<2x4xf32>
    %23 = arith.addf %21, %22 : vector<2x4xf32>
    %cst_19 = arith.constant 0.000000e+00 : f32
    %24 = vector.broadcast %cst_19 : f32 to vector<2x4xf32>
    %25 = arith.maximumf %23, %24 : vector<2x4xf32>
    %cst_20 = arith.constant 0.166666672 : f32
    %26 = vector.broadcast %cst_20 : f32 to vector<2x4xf32>
    %27 = arith.mulf %25, %26 : vector<2x4xf32>
    %c0_21 = arith.constant 0 : index
    %c0_22 = arith.constant 0 : index
    %28 = vector.load %arg4[%c0_21, %c0_22] : memref<8x2xf32, #tpu.memory_space<vmem>>, vector<8x2xf32>
    %cst_23 = arith.constant dense<0.000000e+00> : vector<8x4xf32>
    %29 = tpu.matmul %28, %27, %cst_23 {dimension_numbers = #tpu.dot_dimension_numbers<[1], [0], [0], [1], [0, 0, 1, 1], [], []>} : vector<8x2xf32>, vector<2x4xf32>, vector<8x4xf32> -> vector<8x4xf32>
    %30 = arith.mulf %29, %5 : vector<8x4xf32>
    %cst_24 = arith.constant dense<0.000000e+00> : vector<8xf32>
    %31 = vector.multi_reduction <add>, %30, %cst_24 [1] : vector<8x4xf32> to vector<8xf32>
    %32 = vector.shape_cast %31 : vector<8xf32> to vector<8x1xf32>
    %c0_25 = arith.constant 0 : index
    %c0_26 = arith.constant 0 : index
    %33 = vector.load %arg1[%c0_25, %c0_26] : memref<8x256xf32, #tpu.memory_space<vmem>>, vector<8x256xf32>
    %34 = vector.broadcast %32 : vector<8x1xf32> to vector<8x256xf32>
    %35 = arith.mulf %33, %34 : vector<8x256xf32>
    %c0_27 = arith.constant 0 : index
    %c0_28 = arith.constant 0 : index
    %36 = vector.load %arg9[%c0_27, %c0_28] : memref<8x256xf32, #tpu.memory_space<vmem>>, vector<8x256xf32>
    tpu.vector_store %arg9[%c0_27, %c0_28], %35 {strides = array<i32>} : memref<8x256xf32, #tpu.memory_space<vmem>>, vector<8x256xf32>,
    return
  }
  func.func @transform_0(%arg0: i32) -> (i32, i32) {
    %c0_i32 = arith.constant 0 : i32
    %c0_i32_0 = arith.constant 0 : i32
    return %arg0, %c0_i32 : i32, i32
  }
  func.func @transform_1(%arg0: i32) -> (i32, i32) {
    %c0_i32 = arith.constant 0 : i32
    %c0_i32_0 = arith.constant 0 : i32
    %c0_i32_1 = arith.constant 0 : i32
    return %c0_i32, %c0_i32_0 : i32, i32
  }
  func.func @transform_2(%arg0: i32) -> (i32, i32) {
    %c0_i32 = arith.constant 0 : i32
    %c0_i32_0 = arith.constant 0 : i32
    %c0_i32_1 = arith.constant 0 : i32
    return %c0_i32, %c0_i32_0 : i32, i32
  }
  func.func @transform_3(%arg0: i32) -> (i32, i32) {
    %c0_i32 = arith.constant 0 : i32
    %c0_i32_0 = arith.constant 0 : i32
    %c0_i32_1 = arith.constant 0 : i32
    return %c0_i32, %c0_i32_0 : i32, i32
  }
  func.func @transform_4(%arg0: i32) -> (i32, i32) {
    %c0_i32 = arith.constant 0 : i32
    %c0_i32_0 = arith.constant 0 : i32
    %c0_i32_1 = arith.constant 0 : i32
    return %c0_i32, %c0_i32_0 : i32, i32
  }
  func.func @transform_5(%arg0: i32) -> (i32, i32) {
    %c0_i32 = arith.constant 0 : i32
    %c0_i32_0 = arith.constant 0 : i32
    %c0_i32_1 = arith.constant 0 : i32
    return %c0_i32, %c0_i32_0 : i32, i32
  }
  func.func @transform_6(%arg0: i32) -> (i32, i32) {
    %c0_i32 = arith.constant 0 : i32
    %c0_i32_0 = arith.constant 0 : i32
    %c0_i32_1 = arith.constant 0 : i32
    return %c0_i32, %c0_i32_0 : i32, i32
  }
  func.func @transform_7(%arg0: i32) -> (i32, i32) {
    %c0_i32 = arith.constant 0 : i32
    %c0_i32_0 = arith.constant 0 : i32
    %c0_i32_1 = arith.constant 0 : i32
    return %c0_i32, %c0_i32_0 : i32, i32
  }
  func.func @transform_8(%arg0: i32) -> (i32, i32) {
    %c0_i32 = arith.constant 0 : i32
    %c0_i32_0 = arith.constant 0 : i32
    return %arg0, %c0_i32 : i32, i32
  }
}

</mosaic_0001>

<llo_original>
// kernel: tpu_custom_call.1
$region0: #{tpu_custom_call.1}
  #allocation0 [shape = 'u32[]', space=smem, size = 0x4, offset = 0x4, fixed_abs, tag = 'smem constant byte address 0x4 - core index']
  #allocation1 [shape = 'u32[144,128]{1,0:T(1,128)}', space=vmem, size = 0x12000, scoped, tag = 'internal scratch']
  %s0 = inlined_call_operand.vmem [shape: f32[8,256], index: 0, kind: input, shape index: {}]
  %s1 = inlined_call_operand.hbm [shape: f32[2,8], index: 1, kind: input, shape index: {}]
  %s2 = inlined_call_operand.vmem [shape: f32[8,4], index: 2, kind: input, shape index: {}]
  %s3 = inlined_call_operand.vmem [shape: f32[8,2], index: 3, kind: input, shape index: {}]
  %s4 = inlined_call_operand.vmem [shape: f32[4,4], index: 4, kind: input, shape index: {}]
  %s5 = inlined_call_operand.vmem [shape: f32[1,4], index: 5, kind: input, shape index: {}]
  %s6 = inlined_call_operand.vmem [shape: f32[4,4], index: 6, kind: input, shape index: {}]
  %s7 = inlined_call_operand.vmem [shape: f32[1,4], index: 7, kind: input, shape index: {}]
  %s8 = inlined_call_operand.hbm [shape: f32[8,256], index: 8, kind: output, shape index: {}]
  %s9 = sld [smem:[#allocation0]]
  $region46: #{tpu_custom_call.1} parent=0
    _
  %s11 = ssub.s32 1, %s9
  %s12 = scalar_select 0, %s11, %s9
  $region1: #{tpu_custom_call.1} parent=0
    #allocation2 [shape = 'u8[1024]{0}', space=vmem, size = 0x400, scoped, tag = 'input window, operand 1, single buffered']
    #allocation3 [shape = 's32[1]{0}', space=sflag, size = 0x4, scoped, tag = 'scoped memory for tpu_custom_call.1']
    #allocation4 [shape = 's32[1]{0}', space=sflag, size = 0x4, scoped, tag = 'scoped memory for tpu_custom_call.1']
    #allocation5 [shape = 'u8[8192]{0}', space=vmem, size = 0x2000, scoped, tag = 'output window, operand 0, single buffered']
    %13 = vsyncpa [#allocation3], 0
    %14 = vsyncpa [#allocation4], 0
    // Predicated region
    $region2: #{tpu_custom_call.1} parent=1 // pred_check
      _
    $region3: #{tpu_custom_call.1} parent=1 // pred_check_branch
      %16 = sbr.rel (0) target = $region5
    $region4: #{tpu_custom_call.1} parent=1 // pred_region
      _
    $region5: #{tpu_custom_call.1} parent=1 // pred_fallthru
      _
    // Predicated region
    $region6: #{tpu_custom_call.1} parent=1 // pred_check
      _
    $region7: #{tpu_custom_call.1} parent=1 // pred_check_branch
      %18 = sbr.rel (0) target = $region9
    $region8: #{tpu_custom_call.1} parent=1 // pred_region
      %s20 = ssub.s32 32, 32
      %21 = vsyncadd [#allocation3], %s20
      %s23 = sshll.u32 [#allocation2], 4
      %s24 = int_to_ptr.vmem [resolvable:$true] %s23
      %26 = dma.hbm_to_vmem [thread:$0]  %s1, 32, %s24, [#allocation3]
    $region9: #{tpu_custom_call.1} parent=1 // pred_fallthru
      _
    // Predicated region
    $region10: #{tpu_custom_call.1} parent=1 // pred_check
      _
    $region11: #{tpu_custom_call.1} parent=1 // pred_check_branch
      %28 = sbr.rel (0) target = $region13
    $region12: #{tpu_custom_call.1} parent=1 // pred_region
      _
    $region13: #{tpu_custom_call.1} parent=1 // pred_fallthru
      _
    // Predicated region
    $region14: #{tpu_custom_call.1} parent=1 // pred_check
      _
    $region15: #{tpu_custom_call.1} parent=1 // pred_check_branch
      %30 = sbr.rel (0) target = $region17
    $region16: #{tpu_custom_call.1} parent=1 // pred_region
      _
    $region17: #{tpu_custom_call.1} parent=1 // pred_fallthru
      _
    // Predicated region
    $region18: #{tpu_custom_call.1} parent=1 // pred_check
      _
    $region19: #{tpu_custom_call.1} parent=1 // pred_check_branch
      %32 = sbr.rel (0) target = $region21
    $region20: #{tpu_custom_call.1} parent=1 // pred_region
      _
    $region21: #{tpu_custom_call.1} parent=1 // pred_fallthru
      _
    // Predicated region
    $region22: #{tpu_custom_call.1} parent=1 // pred_check
      _
    $region23: #{tpu_custom_call.1} parent=1 // pred_check_branch
      %34 = sbr.rel (0) target = $region25
    $region24: #{tpu_custom_call.1} parent=1 // pred_region
      _
    $region25: #{tpu_custom_call.1} parent=1 // pred_fallthru
      _
    // Predicated region
    $region26: #{tpu_custom_call.1} parent=1 // pred_check
      _
    $region27: #{tpu_custom_call.1} parent=1 // pred_check_branch
      %36 = sbr.rel (0) target = $region29
    $region28: #{tpu_custom_call.1} parent=1 // pred_region
      _
    $region29: #{tpu_custom_call.1} parent=1 // pred_fallthru
      _
    // Predicated region
    $region30: #{tpu_custom_call.1} parent=1 // pred_check
      _
    $region31: #{tpu_custom_call.1} parent=1 // pred_check_branch
      %38 = sbr.rel (0) target = $region33
    $region32: #{tpu_custom_call.1} parent=1 // pred_region
      _
    $region33: #{tpu_custom_call.1} parent=1 // pred_fallthru
      _
    // Predicated region
    $region34: #{tpu_custom_call.1} parent=1 // pred_check
      _
    $region35: #{tpu_custom_call.1} parent=1 // pred_check_branch
      %40 = sbr.rel (0) target = $region37
    $region36: #{tpu_custom_call.1} parent=1 // pred_region
      %41 = dma.done [#allocation3], 32
    $region37: #{tpu_custom_call.1} parent=1 // pred_fallthru
      _
    %v42 = vld [vmem:[%s0] sm:$0xff]
    %v43 = vld [vmem:[%s0 + $0x8] sm:$0xff]
    %v44 = vadd.f32 %v42, %v43
    %45 = vadd.xlane.f32.xlu0 %v44
    %v46 = vpop.xlane.xlu0 %45
    %v47 = vmul.f32 %v46, 0.00390625
    %v48 = vld [vmem:[%s2] sm:$0xff]
    %v49 = vld [vmem:[#allocation2] sm:$0x3]
    %v50 = vmul.f32 %v47, %v48
    %vm51 = vcmask 64512
    %v53 = vsel %vm51, %v49, 0
    %55 = vmatprep.subr.mxu0 0.0
    %56 = vmatpush1.msra.mxu0 %v50
    %57 = vmatprep.subr.mxu0 0.0
    %58 = vmatpush1.msra.mxu0 0.0
    %59 = vmatprep.subr.mxu0 0.0
    %60 = vmatpush1.msra.mxu0 0.0
    %61 = vmatprep.subr.mxu0 0.0
    %62 = vmatpush1.msra.mxu0 0.0
    %63 = vmatprep.subr.mxu0 0.0
    %64 = vmatpush1.msra.mxu0 0.0
    %65 = vmatprep.subr.mxu0 0.0
    %66 = vmatpush1.msra.mxu0 0.0
    %67 = vmatprep.subr.mxu0 0.0
    %68 = vmatpush1.msra.mxu0 0.0
    %69 = vmatprep.subr.mxu0 0.0
    %70 = vmatpush1.msra.mxu0 0.0
    %71 = vmatprep.subr.mxu0 0.0
    %72 = vmatpush1.msra.mxu0 0.0
    %73 = vmatprep.subr.mxu0 0.0
    %74 = vmatpush1.msra.mxu0 0.0
    %75 = vmatprep.subr.mxu0 0.0
    %76 = vmatpush1.msra.mxu0 0.0
    %77 = vmatprep.subr.mxu0 0.0
    %78 = vmatpush1.msra.mxu0 0.0
    %79 = vmatprep.subr.mxu0 0.0
    %80 = vmatpush1.msra.mxu0 0.0
    %81 = vmatprep.subr.mxu0 0.0
    %82 = vmatpush1.msra.mxu0 0.0
    %83 = vmatprep.subr.mxu0 0.0
    %84 = vmatpush1.msra.mxu0 0.0
    %85 = vmatprep.subr.mxu0 0.0
    %86 = vmatpush1.msra.mxu0 0.0
    %87 = vmatprep.subr.mxu0 0.0
    %88 = vmatpush1.msra.mxu0 0.0
    %89 = vmatprep.subr.mxu0 0.0
    %90 = vmatpush1.msra.mxu0 0.0
    %91 = vmatprep.subr.mxu0 0.0
    %92 = vmatpush1.msra.mxu0 0.0
    %93 = vmatprep.subr.mxu0 0.0
    %94 = vmatpush1.msra.mxu0 0.0
    %95 = vmatprep.subr.mxu0 0.0
    %96 = vmatpush1.msra.mxu0 0.0
    %97 = vmatprep.subr.mxu0 0.0
    %98 = vmatpush1.msra.mxu0 0.0
    %99 = vmatprep.subr.mxu0 0.0
    %100 = vmatpush1.msra.mxu0 0.0
    %101 = vmatprep.subr.mxu0 0.0
    %102 = vmatpush1.msra.mxu0 0.0
    %103 = vmatprep.subr.mxu0 0.0
    %104 = vmatpush1.msra.mxu0 0.0
    %105 = vmatprep.subr.mxu0 0.0
    %106 = vmatpush1.msra.mxu0 0.0
    %107 = vmatprep.subr.mxu0 0.0
    %108 = vmatpush1.msra.mxu0 0.0
    %109 = vmatprep.subr.mxu0 0.0
    %110 = vmatpush1.msra.mxu0 0.0
    %111 = vmatprep.subr.mxu0 0.0
    %112 = vmatpush1.msra.mxu0 0.0
    %113 = vmatprep.subr.mxu0 0.0
    %114 = vmatpush1.msra.mxu0 0.0
    %115 = vmatprep.subr.mxu0 0.0
    %116 = vmatpush1.msra.mxu0 0.0
    %117 = vmatprep.subr.mxu0 0.0
    %118 = vmatpush1.msra.mxu0 0.0
    %119 = vmatprep.mubr.f32.mxu0 0.0
    %120 = vmatmul.mubr.f32.gmra.mrb[0].mxu0 %v53
    %v121 = vpop.f32.mrb[0].mxu0
    %v122 = vadd.f32 0.0, %v121
    %v123 = vpop.f32.mrb[0].mxu0
    %124 = vdwg.mxu0
    %v125 = vld [vmem:[%s4] sm:$0xf]
    %v126 = vld [vmem:[%s5] sm:$0x1]
    %v128 = vlaneseq
    %v129 = vshrl.u32 %v128, 7
    %v130 = vsub.s32 0, %v129
    %v131 = vrot.slane %v126, %v130
    %vm133 = vcmask 31744
    %v135 = vsel %vm133, %v122, 0
    %vm137 = vcmask 1043456
    %v139 = vsel %vm137, %v125, 0
    %141 = vmatprep.subr.mxu0 0.0
    %142 = vmatpush1.msra.mxu0 %v139
    %143 = vmatprep.subr.mxu0 0.0
    %144 = vmatpush1.msra.mxu0 0.0
    %145 = vmatprep.subr.mxu0 0.0
    %146 = vmatpush1.msra.mxu0 0.0
    %147 = vmatprep.subr.mxu0 0.0
    %148 = vmatpush1.msra.mxu0 0.0
    %149 = vmatprep.subr.mxu0 0.0
    %150 = vmatpush1.msra.mxu0 0.0
    %151 = vmatprep.subr.mxu0 0.0
    %152 = vmatpush1.msra.mxu0 0.0
    %153 = vmatprep.subr.mxu0 0.0
    %154 = vmatpush1.msra.mxu0 0.0
    %155 = vmatprep.subr.mxu0 0.0
    %156 = vmatpush1.msra.mxu0 0.0
    %157 = vmatprep.subr.mxu0 0.0
    %158 = vmatpush1.msra.mxu0 0.0
    %159 = vmatprep.subr.mxu0 0.0
    %160 = vmatpush1.msra.mxu0 0.0
    %161 = vmatprep.subr.mxu0 0.0
    %162 = vmatpush1.msra.mxu0 0.0
    %163 = vmatprep.subr.mxu0 0.0
    %164 = vmatpush1.msra.mxu0 0.0
    %165 = vmatprep.subr.mxu0 0.0
    %166 = vmatpush1.msra.mxu0 0.0
    %167 = vmatprep.subr.mxu0 0.0
    %168 = vmatpush1.msra.mxu0 0.0
    %169 = vmatprep.subr.mxu0 0.0
    %170 = vmatpush1.msra.mxu0 0.0
    %171 = vmatprep.subr.mxu0 0.0
    %172 = vmatpush1.msra.mxu0 0.0
    %173 = vmatprep.subr.mxu0 0.0
    %174 = vmatpush1.msra.mxu0 0.0
    %175 = vmatprep.subr.mxu0 0.0
    %176 = vmatpush1.msra.mxu0 0.0
    %177 = vmatprep.subr.mxu0 0.0
    %178 = vmatpush1.msra.mxu0 0.0
    %179 = vmatprep.subr.mxu0 0.0
    %180 = vmatpush1.msra.mxu0 0.0
    %181 = vmatprep.subr.mxu0 0.0
    %182 = vmatpush1.msra.mxu0 0.0
    %183 = vmatprep.subr.mxu0 0.0
    %184 = vmatpush1.msra.mxu0 0.0
    %185 = vmatprep.subr.mxu0 0.0
    %186 = vmatpush1.msra.mxu0 0.0
    %187 = vmatprep.subr.mxu0 0.0
    %188 = vmatpush1.msra.mxu0 0.0
    %189 = vmatprep.subr.mxu0 0.0
    %190 = vmatpush1.msra.mxu0 0.0
    %191 = vmatprep.subr.mxu0 0.0
    %192 = vmatpush1.msra.mxu0 0.0
    %193 = vmatprep.subr.mxu0 0.0
    %194 = vmatpush1.msra.mxu0 0.0
    %195 = vmatprep.subr.mxu0 0.0
    %196 = vmatpush1.msra.mxu0 0.0
    %197 = vmatprep.subr.mxu0 0.0
    %198 = vmatpush1.msra.mxu0 0.0
    %199 = vmatprep.subr.mxu0 0.0
    %200 = vmatpush1.msra.mxu0 0.0
    %201 = vmatprep.subr.mxu0 0.0
    %202 = vmatpush1.msra.mxu0 0.0
    %203 = vmatprep.subr.mxu0 0.0
    %204 = vmatpush1.msra.mxu0 0.0
    %205 = vmatprep.mubr.f32.mxu0 0.0
    %206 = vmatmul.mubr.f32.gmra.mrb[0].mxu0 %v135
    %v207 = vpop.f32.mrb[0].mxu0
    %v208 = vadd.f32 %v131, %v207
    %v209 = vpop.f32.mrb[0].mxu0
    %210 = vdwg.mxu0
    %v211 = vmax.f32 %v208, 0.0
    %v212 = vld [vmem:[%s6] sm:$0xf]
    %v213 = vld [vmem:[%s7] sm:$0x1]
    %v215 = vlaneseq
    %v216 = vshrl.u32 %v215, 7
    %v217 = vsub.s32 0, %v216
    %v218 = vrot.slane %v213, %v217
    %v221 = vsel %vm133, %v211, 0
    %v224 = vsel %vm137, %v212, 0
    %226 = vmatprep.subr.mxu0 0.0
    %227 = vmatpush1.msra.mxu0 %v224
    %228 = vmatprep.subr.mxu0 0.0
    %229 = vmatpush1.msra.mxu0 0.0
    %230 = vmatprep.subr.mxu0 0.0
    %231 = vmatpush1.msra.mxu0 0.0
    %232 = vmatprep.subr.mxu0 0.0
    %233 = vmatpush1.msra.mxu0 0.0
    %234 = vmatprep.subr.mxu0 0.0
    %235 = vmatpush1.msra.mxu0 0.0
    %236 = vmatprep.subr.mxu0 0.0
    %237 = vmatpush1.msra.mxu0 0.0
    %238 = vmatprep.subr.mxu0 0.0
    %239 = vmatpush1.msra.mxu0 0.0
    %240 = vmatprep.subr.mxu0 0.0
    %241 = vmatpush1.msra.mxu0 0.0
    %242 = vmatprep.subr.mxu0 0.0
    %243 = vmatpush1.msra.mxu0 0.0
    %244 = vmatprep.subr.mxu0 0.0
    %245 = vmatpush1.msra.mxu0 0.0
    %246 = vmatprep.subr.mxu0 0.0
    %247 = vmatpush1.msra.mxu0 0.0
    %248 = vmatprep.subr.mxu0 0.0
    %249 = vmatpush1.msra.mxu0 0.0
    %250 = vmatprep.subr.mxu0 0.0
    %251 = vmatpush1.msra.mxu0 0.0
    %252 = vmatprep.subr.mxu0 0.0
    %253 = vmatpush1.msra.mxu0 0.0
    %254 = vmatprep.subr.mxu0 0.0
    %255 = vmatpush1.msra.mxu0 0.0
    %256 = vmatprep.subr.mxu0 0.0
    %257 = vmatpush1.msra.mxu0 0.0
    %258 = vmatprep.subr.mxu0 0.0
    %259 = vmatpush1.msra.mxu0 0.0
    %260 = vmatprep.subr.mxu0 0.0
    %261 = vmatpush1.msra.mxu0 0.0
    %262 = vmatprep.subr.mxu0 0.0
    %263 = vmatpush1.msra.mxu0 0.0
    %264 = vmatprep.subr.mxu0 0.0
    %265 = vmatpush1.msra.mxu0 0.0
    %266 = vmatprep.subr.mxu0 0.0
    %267 = vmatpush1.msra.mxu0 0.0
    %268 = vmatprep.subr.mxu0 0.0
    %269 = vmatpush1.msra.mxu0 0.0
    %270 = vmatprep.subr.mxu0 0.0
    %271 = vmatpush1.msra.mxu0 0.0
    %272 = vmatprep.subr.mxu0 0.0
    %273 = vmatpush1.msra.mxu0 0.0
    %274 = vmatprep.subr.mxu0 0.0
    %275 = vmatpush1.msra.mxu0 0.0
    %276 = vmatprep.subr.mxu0 0.0
    %277 = vmatpush1.msra.mxu0 0.0
    %278 = vmatprep.subr.mxu0 0.0
    %279 = vmatpush1.msra.mxu0 0.0
    %280 = vmatprep.subr.mxu0 0.0
    %281 = vmatpush1.msra.mxu0 0.0
    %282 = vmatprep.subr.mxu0 0.0
    %283 = vmatpush1.msra.mxu0 0.0
    %284 = vmatprep.subr.mxu0 0.0
    %285 = vmatpush1.msra.mxu0 0.0
    %286 = vmatprep.subr.mxu0 0.0
    %287 = vmatpush1.msra.mxu0 0.0
    %288 = vmatprep.subr.mxu0 0.0
    %289 = vmatpush1.msra.mxu0 0.0
    %290 = vmatprep.mubr.f32.mxu0 0.0
    %291 = vmatmul.mubr.f32.gmra.mrb[0].mxu0 %v221
    %v292 = vpop.f32.mrb[0].mxu0
    %v293 = vadd.f32 %v218, %v292
    %v294 = vpop.f32.mrb[0].mxu0
    %295 = vdwg.mxu0
    %v296 = vadd.f32 %v293, 3.0
    %v297 = vmax.f32 %v296, 0.0
    %v298 = vmul.f32 %v297, 0.16666667
    %v299 = vld [vmem:[%s3] sm:$0xff]
    %vm300 = vcmask 15360
    %v302 = vsel %vm300, %v299, 0
    %vm304 = vcmask 1041408
    %v306 = vsel %vm304, %v298, 0
    %308 = vmatprep.subr.mxu0 0.0
    %309 = vmatpush1.msra.mxu0 %v306
    %310 = vmatprep.subr.mxu0 0.0
    %311 = vmatpush1.msra.mxu0 0.0
    %312 = vmatprep.subr.mxu0 0.0
    %313 = vmatpush1.msra.mxu0 0.0
    %314 = vmatprep.subr.mxu0 0.0
    %315 = vmatpush1.msra.mxu0 0.0
    %316 = vmatprep.subr.mxu0 0.0
    %317 = vmatpush1.msra.mxu0 0.0
    %318 = vmatprep.subr.mxu0 0.0
    %319 = vmatpush1.msra.mxu0 0.0
    %320 = vmatprep.subr.mxu0 0.0
    %321 = vmatpush1.msra.mxu0 0.0
    %322 = vmatprep.subr.mxu0 0.0
    %323 = vmatpush1.msra.mxu0 0.0
    %324 = vmatprep.subr.mxu0 0.0
    %325 = vmatpush1.msra.mxu0 0.0
    %326 = vmatprep.subr.mxu0 0.0
    %327 = vmatpush1.msra.mxu0 0.0
    %328 = vmatprep.subr.mxu0 0.0
    %329 = vmatpush1.msra.mxu0 0.0
    %330 = vmatprep.subr.mxu0 0.0
    %331 = vmatpush1.msra.mxu0 0.0
    %332 = vmatprep.subr.mxu0 0.0
    %333 = vmatpush1.msra.mxu0 0.0
    %334 = vmatprep.subr.mxu0 0.0
    %335 = vmatpush1.msra.mxu0 0.0
    %336 = vmatprep.subr.mxu0 0.0
    %337 = vmatpush1.msra.mxu0 0.0
    %338 = vmatprep.subr.mxu0 0.0
    %339 = vmatpush1.msra.mxu0 0.0
    %340 = vmatprep.subr.mxu0 0.0
    %341 = vmatpush1.msra.mxu0 0.0
    %342 = vmatprep.subr.mxu0 0.0
    %343 = vmatpush1.msra.mxu0 0.0
    %344 = vmatprep.subr.mxu0 0.0
    %345 = vmatpush1.msra.mxu0 0.0
    %346 = vmatprep.subr.mxu0 0.0
    %347 = vmatpush1.msra.mxu0 0.0
    %348 = vmatprep.subr.mxu0 0.0
    %349 = vmatpush1.msra.mxu0 0.0
    %350 = vmatprep.subr.mxu0 0.0
    %351 = vmatpush1.msra.mxu0 0.0
    %352 = vmatprep.subr.mxu0 0.0
    %353 = vmatpush1.msra.mxu0 0.0
    %354 = vmatprep.subr.mxu0 0.0
    %355 = vmatpush1.msra.mxu0 0.0
    %356 = vmatprep.subr.mxu0 0.0
    %357 = vmatpush1.msra.mxu0 0.0
    %358 = vmatprep.subr.mxu0 0.0
    %359 = vmatpush1.msra.mxu0 0.0
    %360 = vmatprep.subr.mxu0 0.0
    %361 = vmatpush1.msra.mxu0 0.0
    %362 = vmatprep.subr.mxu0 0.0
    %363 = vmatpush1.msra.mxu0 0.0
    %364 = vmatprep.subr.mxu0 0.0
    %365 = vmatpush1.msra.mxu0 0.0
    %366 = vmatprep.subr.mxu0 0.0
    %367 = vmatpush1.msra.mxu0 0.0
    %368 = vmatprep.subr.mxu0 0.0
    %369 = vmatpush1.msra.mxu0 0.0
    %370 = vmatprep.subr.mxu0 0.0
    %371 = vmatpush1.msra.mxu0 0.0
    %372 = vmatprep.mubr.f32.mxu0 0.0
    %373 = vmatmul.mubr.f32.gmra.mrb[0].mxu0 %v302
    %v374 = vpop.f32.mrb[0].mxu0
    %v375 = vadd.f32 0.0, %v374
    %v376 = vpop.f32.mrb[0].mxu0
    %377 = vdwg.mxu0
    %v378 = vmul.f32 %v375, %v48
    %v379 = vsel %vm133, %v378, 0.0
    %380 = vadd.xlane.f32.xlu0 %v379
    %v381 = vpop.xlane.xlu0 %380
    %v382 = vmul.f32 %v42, %v381
    %v383 = vmul.f32 %v43, %v381
    %384 = vst [vmem:[#allocation5] sm:$0xff] %v382
    %385 = vst [vmem:[#allocation5 + $0x8] sm:$0xff] %v383
    // Predicated region
    $region38: #{tpu_custom_call.1} parent=1 // pred_check
      _
    $region39: #{tpu_custom_call.1} parent=1 // pred_check_branch
      %387 = sbr.rel (0) target = $region41
    $region40: #{tpu_custom_call.1} parent=1 // pred_region
      %s389 = ssub.s32 256, 256
      %390 = vsyncadd [#allocation4], %s389
      %s392 = sshll.u32 [#allocation5], 4
      %s393 = int_to_ptr.vmem [resolvable:$true] %s392
      %395 = dma.vmem_to_hbm [thread:$0]  %s393, 256, %s8, [#allocation4]
    $region41: #{tpu_custom_call.1} parent=1 // pred_fallthru
      _
    // Predicated region
    $region42: #{tpu_custom_call.1} parent=1 // pred_check
      _
    $region43: #{tpu_custom_call.1} parent=1 // pred_check_branch
      %397 = sbr.rel (0) target = $region45
    $region44: #{tpu_custom_call.1} parent=1 // pred_region
      %398 = dma.done [#allocation4], 256
    $region45: #{tpu_custom_call.1} parent=1 // pred_fallthru
      _
    %399 = vsyncpa [#allocation3], 1
    %400 = vsyncpa [#allocation4], 1

</llo_original>
